<compile_context>
chip_gen: v6e
topology: v6e:2x2x1
jax: 0.10.0
libtpu: 0.0.40
codegen_flags: <defaults>
</compile_context>

<pallas_src>
import functools

import jax
import jax.numpy as jnp
from jax.experimental import pallas as pl
from jax.experimental.pallas import tpu as pltpu


def _round_up(x, m):
    return ((x + m - 1) // m) * m


def _fused_heads_kernel(x_ref, w_ref, b_ref, out_ref):
    # x: (TILE_N, H), w: (H, Fp), b: (1, Fp), out: (TILE_N, Fp)
    acc = jnp.dot(x_ref[...], w_ref[...], preferred_element_type=jnp.float32)
    out_ref[...] = (acc + b_ref[...]).astype(out_ref.dtype)


def _choose_tile_n(n_pad8, h, fp, bytes_per_elem=4, budget=24 * 1024 * 1024):
    """Largest row tile (multiple of 8, <=1024) whose double-buffered x/out tiles plus
    resident fused weights fit a conservative VMEM budget (safe for v7x/v6e/v5e)."""
    fixed = h * fp * bytes_per_elem + fp * bytes_per_elem        # resident W + bias
    per_row = 2 * (h + fp) * bytes_per_elem                      # double-buffered x + out
    avail = max(budget - fixed, 8 * per_row)
    tile = max(8, (avail // per_row) // 8 * 8)
    tile = min(tile, 1024, n_pad8)
    return tile


@functools.partial(jax.jit, static_argnames=())
def _fused_linear_heads(x2d, w_fused, b_fused, n_rows, fp):
    """x2d: (N_pad, H) already row-padded to a multiple of TILE_N; w_fused: (H, Fp)."""
    n_pad, h = x2d.shape
    tile_n = x2d.shape[0] // max(1, x2d.shape[0] // x2d.shape[0])  # placeholder, replaced below
    return x2d  # never used; real path goes through multi_in_multi_out


def _run_fused_heads(x2d_pad, w_pad, b_pad, tile_n):
    n_pad, h = x2d_pad.shape
    fp = w_pad.shape[1]
    grid = (n_pad // tile_n,)

    cost = pl.CostEstimate(
        flops=2 * n_pad * h * fp,
        transcendentals=0,
        bytes_accessed=(n_pad * h + h * fp + fp + n_pad * fp) * 4,
    )

    out = pl.pallas_call(
        _fused_heads_kernel,
        out_shape=jax.ShapeDtypeStruct((n_pad, fp), x2d_pad.dtype),
        grid=grid,
        in_specs=[
            pl.BlockSpec((tile_n, h), lambda i: (i, 0)),   # x tile, pipelined over rows
            pl.BlockSpec((h, fp), lambda i: (0, 0)),       # fused weights, resident
            pl.BlockSpec((1, fp), lambda i: (0, 0)),       # fused bias, resident
        ],
        out_specs=pl.BlockSpec((tile_n, fp), lambda i: (i, 0)),
        compiler_params=pltpu.CompilerParams(
            dimension_semantics=("parallel",),
        ),
        cost_estimate=cost,
    )(x2d_pad, w_pad, b_pad)
    return out


def multi_in_multi_out(inputs, params):
    """Pallas implementation of MultiInMultiOut.forward.

    inputs : nested structure; both branches use input_path [0, -1] -> x = inputs[0][-1],
             shape (B, T, H).
    params : dict with 'w_mask' (H, F), 'b_mask' (F,), 'w_vad' (H, 1), 'b_vad' (1,)
    returns: dict {'denoising_mask_logits': (B, T, F), 'vad_logits': (B, T, 1)}
    """
    # --- replicate the input-path indexing of the PyTorch forward ---
    input_map = {
        'denoising_mask_logits': [0, -1],
        'vad_logits': [0, -1],
    }
    resolved = {}
    for branch_name, path in input_map.items():
        x = inputs
        if path is not None:
            for p in path:
                x = x[p]
        resolved[branch_name] = x

    x = resolved['denoising_mask_logits']  # identical tensor for both branches
    B, T, H = x.shape
    N = B * T
    F = params['w_mask'].shape[1]

    # --- fuse the two heads into one lane-dense padded matmul ---
    w_fused = jnp.concatenate([params['w_mask'], params['w_vad']], axis=1)       # (H, F+1)
    b_fused = jnp.concatenate([params['b_mask'], params['b_vad']], axis=0)       # (F+1,)
    fp = _round_up(F + 1, 128)
    w_pad = jnp.zeros((H, fp), w_fused.dtype).at[:, : F + 1].set(w_fused)
    b_pad = jnp.zeros((1, fp), b_fused.dtype).at[:, : F + 1].set(b_fused)

    # --- tile the B*T row dimension ---
    x2d = x.reshape(N, H)
    n_pad8 = _round_up(N, 8)
    tile_n = _choose_tile_n(n_pad8, H, fp)
    n_pad = _round_up(N, tile_n)
    if n_pad != N:
        x2d = jnp.zeros((n_pad, H), x2d.dtype).at[:N, :].set(x2d)

    out2d = _run_fused_heads(x2d, w_pad, b_pad, tile_n)

    mask2d = out2d[:N, :F]
    vad2d = out2d[:N, F : F + 1]
    return {
        'denoising_mask_logits': mask2d.reshape(B, T, F),
        'vad_logits': vad2d.reshape(B, T, 1),
    }


def init_params(key, hidden, freq_bins):
    """PyTorch Linear stores (out, in); we keep the transposed (in, out) layout."""
    k1, k2, k3, k4 = jax.random.split(key, 4)
    scale = 1.0 / jnp.sqrt(hidden)
    return {
        'w_mask': jax.random.uniform(k1, (hidden, freq_bins), jnp.float32, -scale, scale),
        'b_mask': jax.random.uniform(k2, (freq_bins,), jnp.float32, -scale, scale),
        'w_vad': jax.random.uniform(k3, (hidden, 1), jnp.float32, -scale, scale),
        'b_vad': jax.random.uniform(k4, (1,), jnp.float32, -scale, scale),
    }


if __name__ == "__main__":
    key = jax.random.PRNGKey(0)
    kx, kp, ke = jax.random.split(key, 3)

    B, T, H, F = 2, 8, 32, 16

    # Build a nested input structure such that inputs[0][-1] is the (B, T, H)
    # feature tensor (e.g. the last hidden state of an encoder stack).
    encoder_extra = jax.random.normal(ke, (B, T, H), jnp.float32)
    features = jax.random.normal(kx, (B, T, H), jnp.float32)
    inputs = ([encoder_extra, features],)  # inputs[0][-1] == features

    params = init_params(kp, H, F)

    outputs = multi_in_multi_out(inputs, params)
    jax.block_until_ready(outputs)

    # Sanity check against a plain-JAX reference of the same semantics.
    x2d = features.reshape(B * T, H)
    ref_mask = (x2d @ params['w_mask'] + params['b_mask']).reshape(B, T, F)
    ref_vad = (x2d @ params['w_vad'] + params['b_vad']).reshape(B, T, 1)
    assert outputs['denoising_mask_logits'].shape == (B, T, F)
    assert outputs['vad_logits'].shape == (B, T, 1)
    assert jnp.allclose(outputs['denoising_mask_logits'], ref_mask, atol=1e-5)
    assert jnp.allclose(outputs['vad_logits'], ref_vad, atol=1e-5)

    print("KERNEL_OK")
</pallas_src>

<mosaic_0001>
module attributes {stable_mosaic.version = 11 : i64} {
  func.func @_fused_heads_kernel(%arg0: i32, %arg1: memref<16x32xf32, #tpu.memory_space<vmem>>, %arg2: memref<32x128xf32, #tpu.memory_space<vmem>>, %arg3: memref<1x128xf32, #tpu.memory_space<vmem>>, %arg4: memref<16x128xf32, #tpu.memory_space<vmem>>) attributes {dimension_semantics = [#tpu.dimension_semantics<parallel>], iteration_bounds = array<i64: 1>, scalar_prefetch = 0 : i64, scratch_operands = 0 : i64, tpu.core_type = #tpu.core_type<tc>, window_params = [{transform_indices = @transform_0, window_bounds = array<i64: 16, 32>}, {pipeline_mode = #tpu.pipeline_mode<synchronous>, transform_indices = @transform_1, window_bounds = array<i64: 32, 128>}, {pipeline_mode = #tpu.pipeline_mode<synchronous>, transform_indices = @transform_2, window_bounds = array<i64: 1, 128>}, {transform_indices = @transform_3, window_bounds = array<i64: 16, 128>}]} {
    %c0 = arith.constant 0 : index
    %c0_0 = arith.constant 0 : index
    %0 = vector.load %arg1[%c0, %c0_0] : memref<16x32xf32, #tpu.memory_space<vmem>>, vector<16x32xf32>
    %c0_1 = arith.constant 0 : index
    %c0_2 = arith.constant 0 : index
    %1 = vector.load %arg2[%c0_1, %c0_2] : memref<32x128xf32, #tpu.memory_space<vmem>>, vector<32x128xf32>
    %cst = arith.constant dense<0.000000e+00> : vector<16x128xf32>
    %2 = tpu.matmul %0, %1, %cst {dimension_numbers = #tpu.dot_dimension_numbers<[1], [0], [0], [1], [0, 0, 1, 1], [], []>} : vector<16x32xf32>, vector<32x128xf32>, vector<16x128xf32> -> vector<16x128xf32>
    %c0_3 = arith.constant 0 : index
    %c0_4 = arith.constant 0 : index
    %3 = vector.load %arg3[%c0_3, %c0_4] : memref<1x128xf32, #tpu.memory_space<vmem>>, vector<1x128xf32>
    %4 = vector.broadcast %3 : vector<1x128xf32> to vector<16x128xf32>
    %5 = arith.addf %2, %4 : vector<16x128xf32>
    %c0_5 = arith.constant 0 : index
    %c0_6 = arith.constant 0 : index
    %6 = vector.load %arg4[%c0_5, %c0_6] : memref<16x128xf32, #tpu.memory_space<vmem>>, vector<16x128xf32>
    tpu.vector_store %arg4[%c0_5, %c0_6], %5 {strides = array<i32>} : memref<16x128xf32, #tpu.memory_space<vmem>>, vector<16x128xf32>,
    return
  }
  func.func @transform_0(%arg0: i32) -> (i32, i32) {
    %c0_i32 = arith.constant 0 : i32
    %c0_i32_0 = arith.constant 0 : i32
    return %arg0, %c0_i32 : i32, i32
  }
  func.func @transform_1(%arg0: i32) -> (i32, i32) {
    %c0_i32 = arith.constant 0 : i32
    %c0_i32_0 = arith.constant 0 : i32
    %c0_i32_1 = arith.constant 0 : i32
    return %c0_i32, %c0_i32_0 : i32, i32
  }
  func.func @transform_2(%arg0: i32) -> (i32, i32) {
    %c0_i32 = arith.constant 0 : i32
    %c0_i32_0 = arith.constant 0 : i32
    %c0_i32_1 = arith.constant 0 : i32
    return %c0_i32, %c0_i32_0 : i32, i32
  }
  func.func @transform_3(%arg0: i32) -> (i32, i32) {
    %c0_i32 = arith.constant 0 : i32
    %c0_i32_0 = arith.constant 0 : i32
    return %arg0, %c0_i32 : i32, i32
  }
}

</mosaic_0001>

<llo_original>
// kernel: tpu_custom_call.1
$region0: #{tpu_custom_call.1}
  #allocation0 [shape = 'u32[]', space=smem, size = 0x4, offset = 0x4, fixed_abs, tag = 'smem constant byte address 0x4 - core index']
  #allocation1 [shape = 'u32[144,128]{1,0:T(1,128)}', space=vmem, size = 0x12000, scoped, tag = 'internal scratch']
  %s0 = inlined_call_operand.hbm [shape: f32[16,32], index: 0, kind: input, shape index: {}]
  %s1 = inlined_call_operand.hbm [shape: f32[32,128], index: 1, kind: input, shape index: {}]
  %s2 = inlined_call_operand.vmem [shape: f32[1,128], index: 2, kind: input, shape index: {}]
  %s3 = inlined_call_operand.hbm [shape: f32[16,128], index: 3, kind: output, shape index: {}]
  %s4 = sld [smem:[#allocation0]]
  $region30: #{tpu_custom_call.1} parent=0
    _
  %s6 = ssub.s32 1, %s4
  %s7 = scalar_select 0, %s6, %s4
  $region1: #{tpu_custom_call.1} parent=0
    #allocation2 [shape = 'u8[8192]{0}', space=vmem, size = 0x2000, scoped, tag = 'input window, operand 0, single buffered']
    #allocation3 [shape = 's32[1]{0}', space=sflag, size = 0x4, scoped, tag = 'scoped memory for tpu_custom_call.1']
    #allocation4 [shape = 's32[1]{0}', space=sflag, size = 0x4, scoped, tag = 'scoped memory for tpu_custom_call.1']
    #allocation5 [shape = 'u8[16384]{0}', space=vmem, size = 0x4000, scoped, tag = 'input window, operand 1, single buffered']
    #allocation6 [shape = 's32[1]{0}', space=sflag, size = 0x4, scoped, tag = 'scoped memory for tpu_custom_call.1']
    #allocation7 [shape = 'u8[8192]{0}', space=vmem, size = 0x2000, scoped, tag = 'output window, operand 0, single buffered']
    %8 = vsyncpa [#allocation3], 0
    %9 = vsyncpa [#allocation6], 0
    %10 = vsyncpa [#allocation4], 0
    // Predicated region
    $region2: #{tpu_custom_call.1} parent=1 // pred_check
      _
    $region3: #{tpu_custom_call.1} parent=1 // pred_check_branch
      %12 = sbr.rel (0) target = $region5
    $region4: #{tpu_custom_call.1} parent=1 // pred_region
      %s14 = ssub.s32 256, 256
      %15 = vsyncadd [#allocation3], %s14
      %s16 = sshll.u32 [#allocation2], 4
      %s17 = int_to_ptr.vmem [resolvable:$true] %s16
      %22 = dma.hbm_to_vmem [thread:$0]  %s0, 256, %s17, [#allocation3], 128, 128, 8
    $region5: #{tpu_custom_call.1} parent=1 // pred_fallthru
      _
    // Predicated region
    $region6: #{tpu_custom_call.1} parent=1 // pred_check
      _
    $region7: #{tpu_custom_call.1} parent=1 // pred_check_branch
      %24 = sbr.rel (0) target = $region9
    $region8: #{tpu_custom_call.1} parent=1 // pred_region
      %s26 = ssub.s32 512, 512
      %27 = vsyncadd [#allocation6], %s26
      %s28 = sshll.u32 [#allocation5], 4
      %s29 = int_to_ptr.vmem [resolvable:$true] %s28
      %34 = dma.hbm_to_vmem [thread:$0]  %s1, 512, %s29, [#allocation6], 128, 128, 8
    $region9: #{tpu_custom_call.1} parent=1 // pred_fallthru
      _
    // Predicated region
    $region10: #{tpu_custom_call.1} parent=1 // pred_check
      _
    $region11: #{tpu_custom_call.1} parent=1 // pred_check_branch
      %36 = sbr.rel (0) target = $region13
    $region12: #{tpu_custom_call.1} parent=1 // pred_region
      _
    $region13: #{tpu_custom_call.1} parent=1 // pred_fallthru
      _
    // Predicated region
    $region14: #{tpu_custom_call.1} parent=1 // pred_check
      _
    $region15: #{tpu_custom_call.1} parent=1 // pred_check_branch
      %38 = sbr.rel (0) target = $region17
    $region16: #{tpu_custom_call.1} parent=1 // pred_region
      %39 = dma.done [#allocation3], 256
    $region17: #{tpu_custom_call.1} parent=1 // pred_fallthru
      _
    // Predicated region
    $region18: #{tpu_custom_call.1} parent=1 // pred_check
      _
    $region19: #{tpu_custom_call.1} parent=1 // pred_check_branch
      %41 = sbr.rel (0) target = $region21
    $region20: #{tpu_custom_call.1} parent=1 // pred_region
      %42 = dma.done [#allocation6], 512
    $region21: #{tpu_custom_call.1} parent=1 // pred_fallthru
      _
    %v43 = vld [vmem:[#allocation2] sm:$0xff]
    %v44 = vld [vmem:[#allocation2 + $0x8] sm:$0xff]
    %v45 = vld [vmem:[#allocation5] sm:$0xff]
    %v46 = vld [vmem:[#allocation5 + $0x8] sm:$0xff]
    %v47 = vld [vmem:[#allocation5 + $0x10] sm:$0xff]
    %v48 = vld [vmem:[#allocation5 + $0x18] sm:$0xff]
    %v49 = vld [vmem:[%s2] sm:$0x1]
    %v51 = vlaneseq
    %v52 = vshrl.u32 %v51, 7
    %v53 = vsub.s32 0, %v52
    %v54 = vrot.slane %v49, %v53
    %vm56 = vcmask 261120
    %v58 = vsel %vm56, %v43, 0
    %v61 = vsel %vm56, %v44, 0
    %63 = vmatprep.subr.mxu0 0.0
    %64 = vmatpush1.msra.mxu0 0.0
    %65 = vmatprep.subr.mxu0 0.0
    %66 = vmatpush1.msra.mxu0 0.0
    %67 = vmatprep.subr.mxu0 0.0
    %68 = vmatpush1.msra.mxu0 0.0
    %69 = vmatprep.subr.mxu0 0.0
    %70 = vmatpush1.msra.mxu0 0.0
    %71 = vmatprep.subr.mxu0 0.0
    %72 = vmatpush1.msra.mxu0 0.0
    %73 = vmatprep.subr.mxu0 0.0
    %74 = vmatpush1.msra.mxu0 0.0
    %75 = vmatprep.subr.mxu0 0.0
    %76 = vmatpush1.msra.mxu0 0.0
    %77 = vmatprep.subr.mxu0 0.0
    %78 = vmatpush1.msra.mxu0 0.0
    %79 = vmatprep.subr.mxu0 0.0
    %80 = vmatpush1.msra.mxu0 0.0
    %81 = vmatprep.subr.mxu0 0.0
    %82 = vmatpush1.msra.mxu0 0.0
    %83 = vmatprep.subr.mxu0 0.0
    %84 = vmatpush1.msra.mxu0 0.0
    %85 = vmatprep.subr.mxu0 0.0
    %86 = vmatpush1.msra.mxu0 0.0
    %87 = vmatprep.subr.mxu0 0.0
    %88 = vmatpush1.msra.mxu0 %v48
    %89 = vmatprep.subr.mxu0 0.0
    %90 = vmatpush1.msra.mxu0 %v47
    %91 = vmatprep.subr.mxu0 0.0
    %92 = vmatpush1.msra.mxu0 %v46
    %93 = vmatprep.subr.mxu0 0.0
    %94 = vmatpush1.msra.mxu0 %v45
    %95 = vmatprep.subr.mxu0 0.0
    %96 = vmatpush2.msra.mxu0 0.0
    %97 = vmatprep.subr.mxu0 0.0
    %98 = vmatpush2.msra.mxu0 0.0
    %99 = vmatprep.subr.mxu0 0.0
    %100 = vmatpush2.msra.mxu0 0.0
    %101 = vmatprep.subr.mxu0 0.0
    %102 = vmatpush2.msra.mxu0 0.0
    %103 = vmatprep.subr.mxu0 0.0
    %104 = vmatpush2.msra.mxu0 0.0
    %105 = vmatprep.subr.mxu0 0.0
    %106 = vmatpush2.msra.mxu0 0.0
    %107 = vmatprep.subr.mxu0 0.0
    %108 = vmatpush2.msra.mxu0 0.0
    %109 = vmatprep.subr.mxu0 0.0
    %110 = vmatpush2.msra.mxu0 0.0
    %111 = vmatprep.subr.mxu0 0.0
    %112 = vmatpush2.msra.mxu0 0.0
    %113 = vmatprep.subr.mxu0 0.0
    %114 = vmatpush2.msra.mxu0 0.0
    %115 = vmatprep.subr.mxu0 0.0
    %116 = vmatpush2.msra.mxu0 0.0
    %117 = vmatprep.subr.mxu0 0.0
    %118 = vmatpush2.msra.mxu0 0.0
    %119 = vmatprep.subr.mxu0 0.0
    %120 = vmatpush2.msra.mxu0 0.0
    %121 = vmatprep.subr.mxu0 0.0
    %122 = vmatpush2.msra.mxu0 0.0
    %123 = vmatprep.subr.mxu0 0.0
    %124 = vmatpush2.msra.mxu0 0.0
    %125 = vmatprep.subr.mxu0 0.0
    %126 = vmatpush2.msra.mxu0 0.0
    %127 = vmatprep.mubr.f32.mxu0 0.0
    %128 = vmatmul.mubr.f32.gmra.mxu0 %v58
    %v129 = vpop.f32.mrf.mxu0
    %v130 = vadd.f32 %v54, %v129
    %v131 = vpop.f32.mrf.mxu0
    %132 = vmatprep.mubr.f32.mxu0 0.0
    %133 = vmatmul.mubr.f32.gmra.mxu0 %v61
    %v134 = vpop.f32.mrf.mxu0
    %v135 = vadd.f32 %v54, %v134
    %v136 = vpop.f32.mrf.mxu0
    %137 = vdwg.mxu0
    %138 = vst [vmem:[#allocation7] sm:$0xff] %v130
    %139 = vst [vmem:[#allocation7 + $0x8] sm:$0xff] %v135
    // Predicated region
    $region22: #{tpu_custom_call.1} parent=1 // pred_check
      _
    $region23: #{tpu_custom_call.1} parent=1 // pred_check_branch
      %141 = sbr.rel (0) target = $region25
    $region24: #{tpu_custom_call.1} parent=1 // pred_region
      %s143 = ssub.s32 256, 256
      %144 = vsyncadd [#allocation4], %s143
      %s145 = sshll.u32 [#allocation7], 4
      %s146 = int_to_ptr.vmem [resolvable:$true] %s145
      %151 = dma.vmem_to_hbm [thread:$0]  %s146, 256, %s3, [#allocation4], 128, 128, 8
    $region25: #{tpu_custom_call.1} parent=1 // pred_fallthru
      _
    // Predicated region
    $region26: #{tpu_custom_call.1} parent=1 // pred_check
      _
    $region27: #{tpu_custom_call.1} parent=1 // pred_check_branch
      %153 = sbr.rel (0) target = $region29
    $region28: #{tpu_custom_call.1} parent=1 // pred_region
      %154 = dma.done [#allocation4], 256
    $region29: #{tpu_custom_call.1} parent=1 // pred_fallthru
      _
    %155 = vsyncpa [#allocation3], 1
    %156 = vsyncpa [#allocation6], 1
    %157 = vsyncpa [#allocation4], 1

</llo_original>
